<compile_context>
chip_gen: v7x
topology: tpu7x:2x2x1
jax: 0.10.0
libtpu: 0.0.40
codegen_flags: <defaults>
</compile_context>

<pallas_src>
import jax
import jax.numpy as jnp
from jax.experimental import pallas as pl
from jax.experimental.pallas import tpu as pltpu


def _dma_copy_kernel(x_hbm_ref, o_hbm_ref, copy_sem):
    # Single whole-array HBM -> HBM DMA. Zero compute, zero VMEM staging.
    cp = pltpu.make_async_copy(x_hbm_ref, o_hbm_ref, copy_sem)
    cp.start()
    cp.wait()


def _materialized_identity(x):
    """Identity copy into a physically distinct HBM buffer via one DMA."""
    if x.size == 0 or x.ndim == 0:
        # Nothing to DMA (or a scalar); identity is already exact.
        return x

    n = x.size
    itemsize = jnp.dtype(x.dtype).itemsize

    return pl.pallas_call(
        _dma_copy_kernel,
        out_shape=jax.ShapeDtypeStruct(x.shape, x.dtype),
        # Raw HBM refs on both sides: no BlockSpec tiling, no VMEM round-trip.
        in_specs=[pl.BlockSpec(memory_space=pl.ANY)],
        out_specs=pl.BlockSpec(memory_space=pl.ANY),
        scratch_shapes=[pltpu.SemaphoreType.DMA(())],
        # Pure bandwidth op: read n*itemsize + write n*itemsize bytes.
        cost_estimate=pl.CostEstimate(
            flops=0,
            transcendentals=0,
            bytes_accessed=2 * n * itemsize,
        ),
    )(x)


def placeholder_forward(x, force_materialize=False):
    """Identity forward of the NNI Placeholder module.

    Default (recommended) path is a zero-cost `return x`; the Pallas DMA copy
    only runs when a physically distinct output buffer is explicitly forced.
    """
    if not force_materialize:
        # Identity: no HBM round-trip, no kernel launch.
        return x
    return _materialized_identity(x)


class Placeholder:
    """JAX/Pallas analogue of the NNI Placeholder module (identity forward)."""

    def __init__(self, label, **related_info):
        self.label = label
        self.related_info = related_info

    def __call__(self, x, force_materialize=False):
        return placeholder_forward(x, force_materialize=force_materialize)


if __name__ == "__main__":
    key = jax.random.PRNGKey(0)
    # Small NCHW-shaped input consistent with a typical module input.
    x = jax.random.normal(key, (2, 4, 16, 16), dtype=jnp.float32)

    module = Placeholder(label="demo_placeholder", related_info={"note": "identity"})

    # Default (optimized) path: pure identity, returns x directly.
    y_fast = module(x)
    y_fast = jax.block_until_ready(y_fast)
    assert y_fast.shape == x.shape and y_fast.dtype == x.dtype
    assert bool(jnp.all(y_fast == x)), "fast identity path mismatch"

    # Exercise the Pallas HBM->HBM DMA copy (forced-materialization path).
    y_kernel = module(x, force_materialize=True)
    y_kernel = jax.block_until_ready(y_kernel)
    assert y_kernel.shape == x.shape, f"shape mismatch: {y_kernel.shape} vs {x.shape}"
    assert y_kernel.dtype == x.dtype, f"dtype mismatch: {y_kernel.dtype} vs {x.dtype}"
    assert bool(jnp.all(y_kernel == x)), "kernel identity forward mismatch"

    # Also exercise a bf16 input (packed dtype) through the DMA path.
    xb = jax.random.normal(jax.random.PRNGKey(1), (8, 32), dtype=jnp.bfloat16)
    yb = module(xb, force_materialize=True)
    yb = jax.block_until_ready(yb)
    assert yb.shape == xb.shape and yb.dtype == xb.dtype
    assert bool(jnp.all(yb == xb)), "bf16 kernel identity forward mismatch"

    print("KERNEL_OK")
</pallas_src>

<mosaic_0001>
module attributes {stable_mosaic.version = 11 : i64} {
  func.func @_dma_copy_kernel(%arg0: memref<2x4x16x16xf32, #tpu.memory_space<any>>, %arg1: memref<2x4x16x16xf32, #tpu.memory_space<any>>, %arg2: memref<!tpu.dma_semaphore, #tpu.memory_space<semaphore_mem>>) attributes {dimension_semantics = [], scalar_prefetch = 0 : i64, scratch_operands = 1 : i64, tpu.core_type = #tpu.core_type<tc>} {
    tpu.enqueue_dma source(%arg0 : memref<2x4x16x16xf32, #tpu.memory_space<any>>) target(%arg1 : memref<2x4x16x16xf32, #tpu.memory_space<any>>) target_semaphore(%arg2 : memref<!tpu.dma_semaphore, #tpu.memory_space<semaphore_mem>>)
    tpu.wait_dma2 semaphore(%arg2 : memref<!tpu.dma_semaphore, #tpu.memory_space<semaphore_mem>>) src(%arg0 : memref<2x4x16x16xf32, #tpu.memory_space<any>>) dst(%arg1 : memref<2x4x16x16xf32, #tpu.memory_space<any>>)
    return
  }
}

</mosaic_0001>

<llo_original>
// kernel: tpu_custom_call.1
$region0: #{tpu_custom_call.1}
  #allocation0 [shape = 'u32[]', space=smem, size = 0x4, offset = 0x4, fixed_abs, tag = 'smem constant byte address 0x4 - core index']
  #allocation1 [shape = 'u32[144,128]{1,0:T(1,128)}', space=vmem, size = 0x12000, scoped, tag = 'internal scratch']
  #allocation2 [shape = 's32[1]{0}', space=sflag, size = 0x4, scoped, tag = 'scratch operand']
  #allocation3 [shape = 's32[]', space=sflag, size = 0x4, offset = 0, fixed_abs, tag = 'sflag constant byte address 0x0 - dummy sync flag']
  #allocation4 [shape = 'u32[0]{0}', space=smem, size = 0, offset = 0, fixed_abs, tag = 'smem constant byte address 0x0 - null']
  %s0 = inlined_call_operand.hbm [shape: f32[2,4,16,16], index: 0, kind: input, shape index: {}]
  %s1 = inlined_call_operand.hbm [shape: f32[2,4,16,16], index: 1, kind: output, shape index: {}]
  %s2 = sld [smem:[#allocation0]]
  $region2: #{tpu_custom_call.1} parent=0
    _
  %s4 = ssub.s32 1, %s2
  %s5 = scalar_select 0, %s4, %s2
  %s7 = sshll.u32 1, 14
  %s8 = sxor.u32 4294967295, %s7
  %s11 = sshll.u32 3, 24
  %s12 = sxor.u32 4294967295, %s11
  %s13 = sand.u32 0, %s12
  %s15 = sor.u32 %s13, 0
  %18 = dma.general %s0, 2048, %s1, [#allocation2], [#allocation3], [#allocation4], %s15, 0
  %s19 = smul.u32 2, 4
  %s20 = smul.u32 %s19, 16
  %s21 = smul.u32 %s20, 1
  %s22 = sshll.u32 %s21, 4
  %23 = dma.done [#allocation2], %s22
  %24 = vsyncmov [#allocation2]
  %s25 = vpop.sfrf %24
  %p26 = scmp.eq.s32.totalorder %s25, 0
  %p27 = pneg %p26
  %29 = shalt.err (%p27)

</llo_original>
